<compile_context>
chip_gen: v7x
topology: tpu7x:2x2x1
jax: 0.10.0
libtpu: 0.0.40
codegen_flags: <defaults>
</compile_context>

<pallas_src>
import math
import functools

import numpy as np
import jax
import jax.numpy as jnp
from jax import lax
from jax.experimental import pallas as pl
from jax.experimental.pallas import tpu as pltpu


def _make_frequencies_f32(max_res=15.0, min_res=15.0 / 2000.0, div_factor=4):
    """Mirrors the torch __init__ in float32: 2*pi * div_factor**arange(F) / max_res."""
    n_freq = int(math.log(max_res / min_res, div_factor)) + 1
    pows = (np.int64(div_factor) ** np.arange(n_freq)).astype(np.float32)
    freqs = (np.float32(2.0 * math.pi) * pows) / np.float32(max_res)
    return freqs.astype(np.float32)  # (F,)


def _sinusoid_kernel(x_ref, o_ref, *, freqs_host, n_freq, exact_cos):
    # x_ref: (1, tile_n)    -- N on lanes, fully dense vregs
    # o_ref: (2F, tile_n)   -- sin rows [0:F], cos rows [F:2F]
    two_f = 2 * n_freq

    # Frequency / phase columns built from iota + scalar constants (nothing
    # captured, no extra input DMA).
    rows = lax.broadcasted_iota(jnp.int32, (two_f, 1), 0)            # (2F, 1)
    f_idx = jnp.where(rows < n_freq, rows, rows - n_freq)            # 0..F-1 twice
    freq = jnp.where(f_idx == 0, freqs_host[0], 0.0)
    for k in range(1, n_freq):
        freq = jnp.where(f_idx == k, freqs_host[k], freq)            # (2F, 1) f32

    x = jnp.sqrt(x_ref[...] + 1e-8)                                  # (1, tile_n)
    emb = freq * x                                                    # (2F, tile_n)

    if exact_cos:
        # Bit-faithful to the torch module: true cos, two sublane-slab writes.
        o_ref[0:n_freq, :] = jnp.sin(emb[0:n_freq, :]).astype(o_ref.dtype)
        o_ref[n_freq:, :] = jnp.cos(emb[n_freq:, :]).astype(o_ref.dtype)
    else:
        # One unmasked full-block store: cos(t) = sin(t + pi/2).
        phase = jnp.where(rows < n_freq, 0.0, 0.5 * math.pi)          # (2F, 1)
        o_ref[...] = jnp.sin(emb + phase).astype(o_ref.dtype)


def _choose_tiling(n, tile_max=32768):
    """128-granular padding; >=2 grid steps when possible (v7x megacore)."""
    n128 = max(128, ((n + 127) // 128) * 128)
    steps = (n128 + tile_max - 1) // tile_max
    if steps < 2 and n128 >= 256:
        steps = 2
    per = (n128 + steps - 1) // steps
    tile = ((per + 127) // 128) * 128
    return tile, steps, steps * tile


def sinusoids_embedding(
    x,
    *,
    max_res=15.0,
    min_res=15.0 / 2000.0,
    div_factor=4,
    lane_major=False,
    exact_cos=False,
    out_dtype=jnp.float32,
    tile_max=32768,
    min_pallas_n=2048,
):
    """x: (N, 1) float -> (N, 2F) (or (2F, N) if lane_major=True)."""
    freqs = _make_frequencies_f32(max_res, min_res, div_factor)      # np (F,)
    n_freq = int(freqs.shape[0])
    N = int(x.shape[0])
    assert x.ndim in (1, 2) and (x.ndim == 1 or x.shape[1] == 1)
    x_flat = x.reshape(N).astype(jnp.float32)

    # Small-N: the pallas_call fixed cost + pad/slice launches dominate; use jnp.
    if N < min_pallas_n:
        emb = jnp.sqrt(x_flat + 1e-8)[:, None] * jnp.asarray(freqs)[None, :]
        out = jnp.concatenate([jnp.sin(emb), jnp.cos(emb)], axis=-1).astype(out_dtype)
        return out.T if lane_major else out

    tile_n, grid, n_pad = _choose_tiling(N, tile_max)
    if n_pad != N:
        x_flat = jnp.pad(x_flat, (0, n_pad - N))
    x_lanes = x_flat.reshape(1, n_pad)

    kernel = functools.partial(
        _sinusoid_kernel,
        freqs_host=[float(f) for f in freqs],
        n_freq=n_freq,
        exact_cos=exact_cos,
    )

    out_t = pl.pallas_call(
        kernel,
        out_shape=jax.ShapeDtypeStruct((2 * n_freq, n_pad), out_dtype),
        grid_spec=pltpu.PrefetchScalarGridSpec(
            num_scalar_prefetch=0,
            grid=(grid,),
            in_specs=[pl.BlockSpec((1, tile_n), lambda i: (0, i))],
            out_specs=pl.BlockSpec((2 * n_freq, tile_n), lambda i: (0, i)),
        ),
        compiler_params=pltpu.CompilerParams(
            dimension_semantics=("parallel",),
        ),
    )(x_lanes)

    if n_pad != N:
        out_t = out_t[:, :N]
    if lane_major:
        return out_t                     # (2F, N), fusion-friendly, no transpose
    # TODO(synk): fold this transpose into the consumer instead of materializing.
    return out_t.T                       # (N, 2F), matches the torch module


def _reference(x, freqs_np):
    freqs = jnp.asarray(freqs_np, dtype=jnp.float32)
    xs = jnp.sqrt(x.reshape(-1, 1).astype(jnp.float32) + 1e-8)
    emb = xs * freqs[None, :]
    return jnp.concatenate([jnp.sin(emb), jnp.cos(emb)], axis=-1)


if __name__ == "__main__":
    freqs_np = _make_frequencies_f32()          # (6,) -> dim = 12
    dim = 2 * freqs_np.shape[0]

    key = jax.random.PRNGKey(0)
    k1, k2 = jax.random.split(key)

    # 1) Main case: single-store phase-trick kernel (forced Pallas path).
    N = 256
    x = jax.random.uniform(k1, (N, 1), jnp.float32, minval=0.0, maxval=4.0)
    ref = _reference(x, freqs_np)
    out = jax.block_until_ready(sinusoids_embedding(x, min_pallas_n=0))
    assert out.shape == (N, dim)
    # cos is realized as sin(t + pi/2); the f32 angle rounding costs at most
    # ~0.5 * ulp(max|emb|) ~= 3e-5 here, hence the relaxed 2e-4 tolerance.
    assert jnp.allclose(out, ref, atol=2e-4, rtol=1e-5), "mismatch (phase-trick path)"

    # 2) Bit-faithful variant (true cos, two slab writes).
    out_e = jax.block_until_ready(sinusoids_embedding(x, exact_cos=True, min_pallas_n=0))
    assert jnp.allclose(out_e, ref, atol=5e-5, rtol=1e-5), "mismatch (exact-cos path)"

    # 3) Lane-major (fusion-friendly, no wrapper transpose) + padding path.
    N2 = 200
    x2 = jax.random.uniform(k2, (N2, 1), jnp.float32, minval=0.0, maxval=4.0)
    ref2 = _reference(x2, freqs_np)
    out2 = jax.block_until_ready(sinusoids_embedding(x2, lane_major=True, min_pallas_n=0))
    assert out2.shape == (dim, N2)
    assert jnp.allclose(out2.T, ref2, atol=2e-4, rtol=1e-5), "mismatch (lane-major path)"

    # 4) Small-N auto dispatch (pure-jnp fallback, identical semantics).
    out3 = jax.block_until_ready(sinusoids_embedding(x2))
    assert out3.shape == (N2, dim)
    assert jnp.allclose(out3, ref2, atol=1e-5, rtol=1e-5), "mismatch (small-N fallback)"

    print("KERNEL_OK")
</pallas_src>

<mosaic_0001>
module attributes {stable_mosaic.version = 11 : i64} {
  func.func @_sinusoid_kernel(%arg0: i32, %arg1: memref<1x128xf32, #tpu.memory_space<vmem>>, %arg2: memref<12x128xf32, #tpu.memory_space<vmem>>) attributes {dimension_semantics = [#tpu.dimension_semantics<parallel>], iteration_bounds = array<i64: 2>, scalar_prefetch = 0 : i64, scratch_operands = 0 : i64, tpu.core_type = #tpu.core_type<tc>, window_params = [{transform_indices = @transform_0, window_bounds = array<i64: 1, 128>}, {transform_indices = @transform_1, window_bounds = array<i64: 12, 128>}]} {
    %0 = tpu.iota {dimensions = array<i32: 0>} : vector<12x1xi32>
    %c6_i32 = arith.constant 6 : i32
    %1 = vector.broadcast %c6_i32 : i32 to vector<12x1xi32>
    %2 = arith.cmpi slt, %0, %1 : vector<12x1xi32>
    %c6_i32_0 = arith.constant 6 : i32
    %3 = vector.broadcast %c6_i32_0 : i32 to vector<12x1xi32>
    %4 = arith.subi %0, %3 : vector<12x1xi32>
    %5 = arith.select %2, %0, %4 : vector<12x1xi1>, vector<12x1xi32>
    %c0_i32 = arith.constant 0 : i32
    %6 = vector.broadcast %c0_i32 : i32 to vector<12x1xi32>
    %7 = arith.cmpi eq, %5, %6 : vector<12x1xi32>
    %cst = arith.constant 0.418879032 : f32
    %cst_1 = arith.constant 0.000000e+00 : f32
    %8 = vector.broadcast %cst : f32 to vector<12x1xf32>
    %9 = vector.broadcast %cst_1 : f32 to vector<12x1xf32>
    %10 = arith.select %7, %8, %9 : vector<12x1xi1>, vector<12x1xf32>
    %c1_i32 = arith.constant 1 : i32
    %11 = vector.broadcast %c1_i32 : i32 to vector<12x1xi32>
    %12 = arith.cmpi eq, %5, %11 : vector<12x1xi32>
    %cst_2 = arith.constant 1.67551613 : f32
    %13 = vector.broadcast %cst_2 : f32 to vector<12x1xf32>
    %14 = arith.select %12, %13, %10 : vector<12x1xi1>, vector<12x1xf32>
    %c2_i32 = arith.constant 2 : i32
    %15 = vector.broadcast %c2_i32 : i32 to vector<12x1xi32>
    %16 = arith.cmpi eq, %5, %15 : vector<12x1xi32>
    %cst_3 = arith.constant 6.70206451 : f32
    %17 = vector.broadcast %cst_3 : f32 to vector<12x1xf32>
    %18 = arith.select %16, %17, %14 : vector<12x1xi1>, vector<12x1xf32>
    %c3_i32 = arith.constant 3 : i32
    %19 = vector.broadcast %c3_i32 : i32 to vector<12x1xi32>
    %20 = arith.cmpi eq, %5, %19 : vector<12x1xi32>
    %cst_4 = arith.constant 26.8082581 : f32
    %21 = vector.broadcast %cst_4 : f32 to vector<12x1xf32>
    %22 = arith.select %20, %21, %18 : vector<12x1xi1>, vector<12x1xf32>
    %c4_i32 = arith.constant 4 : i32
    %23 = vector.broadcast %c4_i32 : i32 to vector<12x1xi32>
    %24 = arith.cmpi eq, %5, %23 : vector<12x1xi32>
    %cst_5 = arith.constant 107.233032 : f32
    %25 = vector.broadcast %cst_5 : f32 to vector<12x1xf32>
    %26 = arith.select %24, %25, %22 : vector<12x1xi1>, vector<12x1xf32>
    %c5_i32 = arith.constant 5 : i32
    %27 = vector.broadcast %c5_i32 : i32 to vector<12x1xi32>
    %28 = arith.cmpi eq, %5, %27 : vector<12x1xi32>
    %cst_6 = arith.constant 428.932129 : f32
    %29 = vector.broadcast %cst_6 : f32 to vector<12x1xf32>
    %30 = arith.select %28, %29, %26 : vector<12x1xi1>, vector<12x1xf32>
    %c0 = arith.constant 0 : index
    %c0_7 = arith.constant 0 : index
    %31 = vector.load %arg1[%c0, %c0_7] : memref<1x128xf32, #tpu.memory_space<vmem>>, vector<1x128xf32>
    %cst_8 = arith.constant 9.99999993E-9 : f32
    %32 = vector.broadcast %cst_8 : f32 to vector<1x128xf32>
    %33 = arith.addf %31, %32 : vector<1x128xf32>
    %34 = math.sqrt %33 : vector<1x128xf32>
    %35 = vector.broadcast %30 : vector<12x1xf32> to vector<12x128xf32>
    %36 = vector.broadcast %34 : vector<1x128xf32> to vector<12x128xf32>
    %37 = arith.mulf %35, %36 : vector<12x128xf32>
    %c6_i32_9 = arith.constant 6 : i32
    %38 = vector.broadcast %c6_i32_9 : i32 to vector<12x1xi32>
    %39 = arith.cmpi slt, %0, %38 : vector<12x1xi32>
    %cst_10 = arith.constant 0.000000e+00 : f32
    %cst_11 = arith.constant 1.57079637 : f32
    %40 = vector.broadcast %cst_10 : f32 to vector<12x1xf32>
    %41 = vector.broadcast %cst_11 : f32 to vector<12x1xf32>
    %42 = arith.select %39, %40, %41 : vector<12x1xi1>, vector<12x1xf32>
    %43 = vector.broadcast %42 : vector<12x1xf32> to vector<12x128xf32>
    %44 = arith.addf %37, %43 : vector<12x128xf32>
    %45 = math.sin %44 : vector<12x128xf32>
    %c0_12 = arith.constant 0 : index
    %c0_13 = arith.constant 0 : index
    %46 = vector.load %arg2[%c0_12, %c0_13] : memref<12x128xf32, #tpu.memory_space<vmem>>, vector<12x128xf32>
    tpu.vector_store %arg2[%c0_12, %c0_13], %45 {strides = array<i32>} : memref<12x128xf32, #tpu.memory_space<vmem>>, vector<12x128xf32>,
    return
  }
  func.func @transform_0(%arg0: i32) -> (i32, i32) {
    %c0_i32 = arith.constant 0 : i32
    %c0_i32_0 = arith.constant 0 : i32
    return %c0_i32, %arg0 : i32, i32
  }
  func.func @transform_1(%arg0: i32) -> (i32, i32) {
    %c0_i32 = arith.constant 0 : i32
    %c0_i32_0 = arith.constant 0 : i32
    return %c0_i32, %arg0 : i32, i32
  }
}

</mosaic_0001>

<llo_original>
// kernel: tpu_custom_call.1
$region0: #{tpu_custom_call.1}
  #allocation0 [shape = 'u32[]', space=smem, size = 0x4, offset = 0x4, fixed_abs, tag = 'smem constant byte address 0x4 - core index']
  #allocation1 [shape = 'u32[144,128]{1,0:T(1,128)}', space=vmem, size = 0x12000, scoped, tag = 'internal scratch']
  %s0 = inlined_call_operand.hbm [shape: f32[1,256], index: 0, kind: input, shape index: {}]
  %s1 = inlined_call_operand.hbm [shape: f32[12,256], index: 1, kind: output, shape index: {}]
  %s2 = sld [smem:[#allocation0]]
  $region41: #{tpu_custom_call.1} parent=0
    _
  %s4 = ssub.s32 1, %s2
  %s5 = scalar_select 0, %s4, %s2
  $region1: #{tpu_custom_call.1} parent=0
    #allocation2 [shape = 'u8[1024]{0}', space=vmem, size = 0x400, scoped, tag = 'input window, operand 0']
    #allocation3 [shape = 's32[2]{0}', space=sflag, size = 0x8, scoped, tag = 'scoped memory for tpu_custom_call.1']
    #allocation4 [shape = 's32[2]{0}', space=sflag, size = 0x8, scoped, tag = 'scoped memory for tpu_custom_call.1']
    #allocation5 [shape = 'u8[16384]{0}', space=vmem, size = 0x4000, scoped, tag = 'output window, operand 0']
    %6 = vsyncpa [#allocation3], 0
    %s7 = scalar_lea.sflag [#allocation3], 1
    %8 = vsyncpa %s7, 0
    %9 = vsyncpa [#allocation4], 0
    %s10 = scalar_lea.sflag [#allocation4], 1
    %11 = vsyncpa %s10, 0
    loop: start=0, step=1, limit=4
    $region2: #{tpu_custom_call.1} parent=1 // loop_pre_header
      _
    $region3: #{tpu_custom_call.1} parent=1 // loop_header
      %s13 = sphi 0, %s17
      %p14 = scmp.ge.s32.totalorder %s13, 4
      %s23 = sphi 0, %s25
      %s26 = sphi 0, %s23
      %s27 = sphi 0, %s26
      %s43 = sphi 0, %s27
      %s49 = sphi 0, %s51
      %s52 = sphi 0, %s49
      %s53 = sphi 0, %s52
      %s69 = sphi 0, %s53
    $region4: #{tpu_custom_call.1} parent=1 // loop_header_branch
      %16 = sbr.rel (%p14) target = $region8
    $region5: #{tpu_custom_call.1} parent=1 // loop_body
      %s18 = ssub.s32 %s13, 1
      %s19 = ssub.s32 %s13, 2
      %s20 = sadd.s32 %s13, 1
      %s21 = ssub.s32 %s13, %s20
      %p22 = scmp.eq.s32.totalorder %s21, 0
      %s24 = sadd.s32 %s23, 1
      %s25 = scalar_select %p22, %s23, %s24
      %p28 = pneg %p22
      %p29 = scmp.eq.s32.totalorder %s13, 1
      %p30 = por %p28, %p29
      %p31 = scmp.ne.s32.totalorder %s23, %s26
      %p32 = scmp.eq.s32.totalorder %s13, 0
      %p33 = por %p31, %p32
      %p34 = scmp.ne.s32.totalorder %s23, %s26
      %p35 = scmp.eq.s32.totalorder %s18, 1
      %p36 = por %p34, %p35
      %p37 = scmp.ne.s32.totalorder %s26, %s27
      %p38 = scmp.eq.s32.totalorder %s18, 0
      %p39 = por %p37, %p38
      %p40 = scmp.ne.s32.totalorder %s26, %s27
      %p41 = scmp.eq.s32.totalorder %s19, 1
      %p42 = por %p40, %p41
      %p44 = scmp.ne.s32.totalorder %s27, %s43
      %p45 = scmp.eq.s32.totalorder %s19, 0
      %p46 = por %p44, %p45
      %s47 = ssub.s32 %s13, %s20
      %p48 = scmp.eq.s32.totalorder %s47, 0
      %s50 = sadd.s32 %s49, 1
      %s51 = scalar_select %p48, %s49, %s50
      %p54 = pneg %p48
      %p55 = scmp.eq.s32.totalorder %s13, 1
      %p56 = por %p54, %p55
      %p57 = scmp.ne.s32.totalorder %s49, %s52
      %p58 = scmp.eq.s32.totalorder %s13, 0
      %p59 = por %p57, %p58
      %p60 = scmp.ne.s32.totalorder %s49, %s52
      %p61 = scmp.eq.s32.totalorder %s18, 1
      %p62 = por %p60, %p61
      %p63 = scmp.ne.s32.totalorder %s52, %s53
      %p64 = scmp.eq.s32.totalorder %s18, 0
      %p65 = por %p63, %p64
      %p66 = scmp.ne.s32.totalorder %s52, %s53
      %p67 = scmp.eq.s32.totalorder %s19, 1
      %p68 = por %p66, %p67
      %p70 = scmp.ne.s32.totalorder %s53, %s69
      %p71 = scmp.eq.s32.totalorder %s19, 0
      %p72 = por %p70, %p71
      %p73 = scmp.le.s32.totalorder 1, %s13
      %p74 = scmp.lt.s32.totalorder %s13, 3
      %p75 = pnand %p73, %p74
      %p76 = pneg %p75
      // Predicated region
      $region9: #{tpu_custom_call.1} parent=5 // pred_check
        _
      $region10: #{tpu_custom_call.1} parent=5 // pred_check_branch
        %78 = sbr.rel (%p75) target = $region12
      $region11: #{tpu_custom_call.1} parent=5 // pred_region
        %s79 = ssub.s32 %s13, 1
      $region12: #{tpu_custom_call.1} parent=5 // pred_fallthru
        _
      %p80 = scmp.lt.s32.totalorder %s13, 2
      // Predicated region
      $region13: #{tpu_custom_call.1} parent=5 // pred_check
        %p81 = pneg %p80
      $region14: #{tpu_custom_call.1} parent=5 // pred_check_branch
        %83 = sbr.rel (%p81) target = $region16
      $region15: #{tpu_custom_call.1} parent=5 // pred_region
        // Predicated region
        $region17: #{tpu_custom_call.1} parent=15 // pred_check
          %p84 = pneg %p33
        $region18: #{tpu_custom_call.1} parent=15 // pred_check_branch
          %86 = sbr.rel (%p84) target = $region20
        $region19: #{tpu_custom_call.1} parent=15 // pred_region
          %s87 = sand.u32 %s23, 1
          %s88 = scalar_lea.sflag [#allocation3], %s87
          %s89 = sand.u32 %s23, 1
          %s90 = scalar_lea.vmem [#allocation2], %s89
          %s92 = ssub.s32 16, 16
          %93 = vsyncadd %s88, %s92
          %s94 = smul.addr %s13, 16
          %s95 = scalar_lea.hbm %s0, %s94
          %s97 = sshll.u32 %s90, 4
          %s98 = int_to_ptr.vmem [resolvable:$true] %s97
          %100 = dma.hbm_to_vmem [thread:$0]  %s95, 16, %s98, %s88
        $region20: #{tpu_custom_call.1} parent=15 // pred_fallthru
          _
      $region16: #{tpu_custom_call.1} parent=5 // pred_fallthru
        _
      %p101 = scmp.le.s32.totalorder 1, %s13
      %p102 = scmp.lt.s32.totalorder %s13, 3
      %p103 = pnand %p101, %p102
      %p104 = pneg %p103
      // Predicated region
      $region21: #{tpu_custom_call.1} parent=5 // pred_check
        _
      $region22: #{tpu_custom_call.1} parent=5 // pred_check_branch
        %106 = sbr.rel (%p103) target = $region24
      $region23: #{tpu_custom_call.1} parent=5 // pred_region
        %s107 = ssub.s32 %s13, 1
        %s108 = sand.u32 %s26, 1
        %s109 = scalar_lea.sflag [#allocation3], %s108
        %s110 = sand.u32 %s26, 1
        %s111 = scalar_lea.vmem [#allocation2], %s110
        // Predicated region
        $region25: #{tpu_custom_call.1} parent=23 // pred_check
          %p112 = pneg %p39
        $region26: #{tpu_custom_call.1} parent=23 // pred_check_branch
          %114 = sbr.rel (%p112) target = $region28
        $region27: #{tpu_custom_call.1} parent=23 // pred_region
          %115 = dma.done %s109, 16
        $region28: #{tpu_custom_call.1} parent=23 // pred_fallthru
          _
        %s116 = sand.u32 %s26, 1
        %s117 = scalar_lea.sflag [#allocation3], %s116
        %s118 = sand.u32 %s26, 1
        %s119 = scalar_lea.vmem [#allocation2], %s118
        %p120 = pneg %p39
        %p121 = pneg %p36
        %p122 = pneg %p65
        %p123 = pneg %p62
        %s124 = sand.u32 %s52, 1
        %s125 = scalar_lea.sflag [#allocation4], %s124
        %s126 = sand.u32 %s52, 1
        %s127 = smul.addr %s126, 16
        %s128 = scalar_lea.vmem [#allocation5], %s127
        %v129 = vlaneseq
        %v130 = vshrl.u32 %v129, 7
        %v131 = vadd.s32 %v130, 8
        %vm132 = vcmp.lt.s32.totalorder %v130, 6
        %vm133 = vcmp.lt.s32.totalorder %v131, 6
        %v134 = vsub.s32 %v130, 6
        %v135 = vsub.s32 %v131, 6
        %v136 = vsel %vm132, %v130, %v134
        %v137 = vsel %vm133, %v131, %v135
        %vm138 = vcmp.eq.s32.totalorder %v136, 0
        %vm139 = vcmp.eq.s32.totalorder %v137, 0
        %v140 = vsel %vm138, 0.41887903, 0.0
        %v141 = vsel %vm139, 0.41887903, 0.0
        %vm142 = vcmp.eq.s32.totalorder %v136, 1
        %vm143 = vcmp.eq.s32.totalorder %v137, 1
        %v144 = vsel %vm142, 1.6755161, %v140
        %v145 = vsel %vm143, 1.6755161, %v141
        %vm146 = vcmp.eq.s32.totalorder %v136, 2
        %vm147 = vcmp.eq.s32.totalorder %v137, 2
        %v148 = vsel %vm146, 6.7020645, %v144
        %v149 = vsel %vm147, 6.7020645, %v145
        %vm150 = vcmp.eq.s32.totalorder %v136, 3
        %vm151 = vcmp.eq.s32.totalorder %v137, 3
        %v152 = vsel %vm150, 26.808258, %v148
        %v153 = vsel %vm151, 26.808258, %v149
        %vm154 = vcmp.eq.s32.totalorder %v136, 4
        %vm155 = vcmp.eq.s32.totalorder %v137, 4
        %v156 = vsel %vm154, 107.23303, %v152
        %v157 = vsel %vm155, 107.23303, %v153
        %vm158 = vcmp.eq.s32.totalorder %v136, 5
        %vm159 = vcmp.eq.s32.totalorder %v137, 5
        %v160 = vsel %vm158, 428.93213, %v156
        %v161 = vsel %vm159, 428.93213, %v157
        %v162 = vld [vmem:[%s111] sm:$0x1]
        %v163 = vadd.f32 %v162, 1e-08
        %v164 = vrsqrt.pop %v163
        %v165 = vmul.f32 %v163, %v164
        %vm166 = vcmp.eq.f32.partialorder %v163, inf
        %v167 = vsel %vm166, %v163, %v165
        %vm168 = vcmp.eq.f32.partialorder %v163, 0.0
        %v169 = vand.u32 %v163, 2147483648
        %v170 = vsel %vm168, %v169, %v167
        %v172 = vlaneseq
        %v173 = vshrl.u32 %v172, 7
        %v174 = vsub.s32 0, %v173
        %v175 = vrot.slane %v170, %v174
        %v177 = vmul.f32 %v160, %v175
        %v178 = vmul.f32 %v161, %v175
        %v179 = vsel %vm132, 0.0, 1.5707964
        %v180 = vsel %vm133, 0.0, 1.5707964
        %v181 = vadd.f32 %v177, %v179
        %v182 = vadd.f32 %v178, %v180
        %v183 = vand.u32 2147483647, %v181
        %vm184 = vcmp.le.f32.partialorder %v183, 0.7853982
        %vm185 = vcmp.lt.s32.totalorder %v181, 0
        %v186 = vand.u32 %v181, 2139095040
        %v187 = vshrl.u32 %v186, 23
        %v188 = vsub.s32 %v187, 127
        %v189 = vand.u32 2147483647, %v181
        %v190 = vand.u32 %v189, 8388607
        %v191 = vor.u32 %v190, 8388608
        %v192 = vsub.s32 0, %v191
        %v193 = vadd.s32 %v188, 1
        %vm194 = vcmp.gt.s32.totalorder %v193, 0
        %v195 = vsel %vm194, %v193, 0
        %v196 = vshrl.u32 %v195, 5
        %v197 = vand.u32 %v195, 31
        %v198 = vsub.s32 32, %v197
        %v199 = vshrl.u32 683565275, %v198
        %v200 = vshll.u32 683565275, %v197
        %v201 = vshrl.u32 2475754826, %v198
        %v202 = vor.u32 %v200, %v201
        %v203 = vshll.u32 2475754826, %v197
        %v204 = vshrl.u32 2131351028, %v198
        %v205 = vor.u32 %v203, %v204
        %v206 = vshll.u32 2131351028, %v197
        %v207 = vshrl.u32 2102212464, %v198
        %v208 = vor.u32 %v206, %v207
        %v209 = vshll.u32 2102212464, %v197
        %v210 = vshrl.u32 920167782, %v198
        %v211 = vor.u32 %v209, %v210
        %v212 = vshll.u32 920167782, %v197
        %v213 = vshrl.u32 1326507024, %v198
        %v214 = vor.u32 %v212, %v213
        %vm215 = vcmp.lt.s32.totalorder %v196, 1
        %vm216 = vcmp.lt.s32.totalorder %v196, 2
        %vm217 = vcmp.lt.s32.totalorder %v196, 3
        %vm218 = vcmp.lt.s32.totalorder %v196, 4
        %v219 = vsel %vm215, %v199, %v202
        %v220 = vsel %vm218, %v208, 2102212464
        %v221 = vsel %vm217, %v205, %v220
        %v222 = vsel %vm216, %v219, %v221
        %v223 = vsel %vm215, %v202, %v205
        %v224 = vsel %vm218, %v211, 920167782
        %v225 = vsel %vm217, %v208, %v224
        %v226 = vsel %vm216, %v223, %v225
        %v227 = vsel %vm215, %v205, %v208
        %v228 = vsel %vm218, %v214, 1326507024
        %v229 = vsel %vm217, %v211, %v228
        %v230 = vsel %vm216, %v227, %v229
        %v231 = vshll.u32 %v191, 8
        %v232 = vmul.u32.u64.compose %v231, %v230
        %v233 = vextract.low.u32 %v232
        %v234 = vextract.high.u32 %v232
        %v235 = vmul.u32.u64.compose %v231, %v226
        %v236 = vextract.low.u32 %v235
        %v237 = vextract.high.u32 %v235
        %v238 = vmul.u32 %v231, %v222
        %v239 = vadd.s32 %v234, %v236
        %vm240 = vc.u32 %v234, %v236
        %v241 = vadd.s32 %v237, 1
        %v242 = vsel %vm240, %v241, %v237
        %v243 = vadd.s32 %v238, %v242
        %v244 = vadd.s32 %v243, 536870912
        %v245 = vshrl.u32 %v244, 30
        %v246 = vshll.u32 %v245, 30
        %v247 = vsub.s32 %v243, %v246
        %vm248 = vcmp.lt.s32.totalorder %v247, 0
        %v249 = vsub.s32 0, %v247
        %v250 = vsel %vm248, %v249, %v247
        %v251 = vclz %v250
        %v252 = vsub.s32 %v251, 2
        %vm253 = vcmp.gt.s32.totalorder 0, %v252
        %v254 = vsel %vm253, 0, %v252
        %v255 = vsub.s32 32, %v254
        %v256 = vshll.u32 %v247, %v254
        %v257 = vshrl.u32 %v239, %v255
        %v258 = vor.u32 %v256, %v257
        %v259 = vsub.s32 4294967266, %v254
        %v260 = vadd.s32 %v259, 127
        %v261 = vshll.u32 %v260, 23
        %v262 = vor.u32 4788187, %v261
        %v263 = vand.u32 2147483647, %v262
        %v265 = vcvt.s32.f32 %v258
        %v266 = vmul.f32 %v265, %v263
        %v267 = vxor.u32 %v266, 2147483648
        %v268 = vsel %vm185, %v267, %v266
        %v269 = vsub.s32 4, %v245
        %v270 = vsel %vm185, %v269, %v245
        %v271 = vsel %vm184, %v181, %v268
        %v272 = vsel %vm184, 0, %v270
        %v273 = vcosq.f32.pop %v271
        %v274 = vsinq.f32.pop %v271
        %vm275 = vweird.f32 %v181
        %v276 = vadd.s32 %v272, 3
        %v277 = vand.u32 %v276, 3
        %vm278 = vcmp.lt.s32.totalorder %v277, 2
        %vm279 = vcmp.eq.s32.totalorder %v277, 0
        %v280 = vxor.u32 %v274, 2147483648
        %v281 = vsel %vm279, %v273, %v280
        %vm282 = vcmp.eq.s32.totalorder %v277, 2
        %v283 = vxor.u32 %v273, 2147483648
        %v284 = vsel %vm282, %v283, %v274
        %v285 = vsel %vm278, %v281, %v284
        %v286 = vsel %vm275, nan, %v285
        %v287 = vand.u32 2147483647, %v182
        %vm288 = vcmp.le.f32.partialorder %v287, 0.7853982
        %vm289 = vcmp.lt.s32.totalorder %v182, 0
        %v290 = vand.u32 %v182, 2139095040
        %v291 = vshrl.u32 %v290, 23
        %v292 = vsub.s32 %v291, 127
        %v293 = vand.u32 2147483647, %v182
        %v294 = vand.u32 %v293, 8388607
        %v295 = vor.u32 %v294, 8388608
        %v296 = vsub.s32 0, %v295
        %v297 = vadd.s32 %v292, 1
        %vm298 = vcmp.gt.s32.totalorder %v297, 0
        %v299 = vsel %vm298, %v297, 0
        %v300 = vshrl.u32 %v299, 5
        %v301 = vand.u32 %v299, 31
        %v302 = vsub.s32 32, %v301
        %v303 = vshrl.u32 683565275, %v302
        %v304 = vshll.u32 683565275, %v301
        %v305 = vshrl.u32 2475754826, %v302
        %v306 = vor.u32 %v304, %v305
        %v307 = vshll.u32 2475754826, %v301
        %v308 = vshrl.u32 2131351028, %v302
        %v309 = vor.u32 %v307, %v308
        %v310 = vshll.u32 2131351028, %v301
        %v311 = vshrl.u32 2102212464, %v302
        %v312 = vor.u32 %v310, %v311
        %v313 = vshll.u32 2102212464, %v301
        %v314 = vshrl.u32 920167782, %v302
        %v315 = vor.u32 %v313, %v314
        %v316 = vshll.u32 920167782, %v301
        %v317 = vshrl.u32 1326507024, %v302
        %v318 = vor.u32 %v316, %v317
        %vm319 = vcmp.lt.s32.totalorder %v300, 1
        %vm320 = vcmp.lt.s32.totalorder %v300, 2
        %vm321 = vcmp.lt.s32.totalorder %v300, 3
        %vm322 = vcmp.lt.s32.totalorder %v300, 4
        %v323 = vsel %vm319, %v303, %v306
        %v324 = vsel %vm322, %v312, 2102212464
        %v325 = vsel %vm321, %v309, %v324
        %v326 = vsel %vm320, %v323, %v325
        %v327 = vsel %vm319, %v306, %v309
        %v328 = vsel %vm322, %v315, 920167782
        %v329 = vsel %vm321, %v312, %v328
        %v330 = vsel %vm320, %v327, %v329
        %v331 = vsel %vm319, %v309, %v312
        %v332 = vsel %vm322, %v318, 1326507024
        %v333 = vsel %vm321, %v315, %v332
        %v334 = vsel %vm320, %v331, %v333
        %v335 = vshll.u32 %v295, 8
        %v336 = vmul.u32.u64.compose %v335, %v334
        %v337 = vextract.low.u32 %v336
        %v338 = vextract.high.u32 %v336
        %v339 = vmul.u32.u64.compose %v335, %v330
        %v340 = vextract.low.u32 %v339
        %v341 = vextract.high.u32 %v339
        %v342 = vmul.u32 %v335, %v326
        %v343 = vadd.s32 %v338, %v340
        %vm344 = vc.u32 %v338, %v340
        %v345 = vadd.s32 %v341, 1
        %v346 = vsel %vm344, %v345, %v341
        %v347 = vadd.s32 %v342, %v346
        %v348 = vadd.s32 %v347, 536870912
        %v349 = vshrl.u32 %v348, 30
        %v350 = vshll.u32 %v349, 30
        %v351 = vsub.s32 %v347, %v350
        %vm352 = vcmp.lt.s32.totalorder %v351, 0
        %v353 = vsub.s32 0, %v351
        %v354 = vsel %vm352, %v353, %v351
        %v355 = vclz %v354
        %v356 = vsub.s32 %v355, 2
        %vm357 = vcmp.gt.s32.totalorder 0, %v356
        %v358 = vsel %vm357, 0, %v356
        %v359 = vsub.s32 32, %v358
        %v360 = vshll.u32 %v351, %v358
        %v361 = vshrl.u32 %v343, %v359
        %v362 = vor.u32 %v360, %v361
        %v363 = vsub.s32 4294967266, %v358
        %v364 = vadd.s32 %v363, 127
        %v365 = vshll.u32 %v364, 23
        %v366 = vor.u32 4788187, %v365
        %v367 = vand.u32 2147483647, %v366
        %v369 = vcvt.s32.f32 %v362
        %v370 = vmul.f32 %v369, %v367
        %v371 = vxor.u32 %v370, 2147483648
        %v372 = vsel %vm289, %v371, %v370
        %v373 = vsub.s32 4, %v349
        %v374 = vsel %vm289, %v373, %v349
        %v375 = vsel %vm288, %v182, %v372
        %v376 = vsel %vm288, 0, %v374
        %v377 = vcosq.f32.pop %v375
        %v378 = vsinq.f32.pop %v375
        %vm379 = vweird.f32 %v182
        %v380 = vadd.s32 %v376, 3
        %v381 = vand.u32 %v380, 3
        %vm382 = vcmp.lt.s32.totalorder %v381, 2
        %vm383 = vcmp.eq.s32.totalorder %v381, 0
        %v384 = vxor.u32 %v378, 2147483648
        %v385 = vsel %vm383, %v377, %v384
        %vm386 = vcmp.eq.s32.totalorder %v381, 2
        %v387 = vxor.u32 %v377, 2147483648
        %v388 = vsel %vm386, %v387, %v378
        %v389 = vsel %vm382, %v385, %v388
        %v390 = vsel %vm379, nan, %v389
        %391 = vst [vmem:[%s128] sm:$0xff] %v286
        %392 = vst [vmem:[%s128 + $0x8] sm:$0xf] %v390
        %s393 = sand.u32 %s52, 1
        %s394 = scalar_lea.sflag [#allocation4], %s393
        %s395 = sand.u32 %s52, 1
        %s396 = smul.addr %s395, 16
        %s397 = scalar_lea.vmem [#allocation5], %s396
        // Predicated region
        $region29: #{tpu_custom_call.1} parent=23 // pred_check
          %p398 = pneg %p62
        $region30: #{tpu_custom_call.1} parent=23 // pred_check_branch
          %400 = sbr.rel (%p398) target = $region32
        $region31: #{tpu_custom_call.1} parent=23 // pred_region
          %s402 = ssub.s32 256, 256
          %403 = vsyncadd %s394, %s402
          %s404 = smul.addr %s18, 128
          %s405 = scalar_lea.hbm %s1, %s404
          %s406 = sshll.u32 %s397, 4
          %s407 = int_to_ptr.vmem [resolvable:$true] %s406
          %412 = dma.vmem_to_hbm [thread:$0]  %s407, 256, %s405, %s394, 128, 256, 8
        $region32: #{tpu_custom_call.1} parent=23 // pred_fallthru
          _
      $region24: #{tpu_custom_call.1} parent=5 // pred_fallthru
        _
      %p413 = scmp.le.s32.totalorder 2, %s13
      // Predicated region
      $region33: #{tpu_custom_call.1} parent=5 // pred_check
        %p414 = pneg %p413
      $region34: #{tpu_custom_call.1} parent=5 // pred_check_branch
        %416 = sbr.rel (%p414) target = $region36
      $region35: #{tpu_custom_call.1} parent=5 // pred_region
        %s417 = ssub.s32 %s13, 2
        // Predicated region
        $region37: #{tpu_custom_call.1} parent=35 // pred_check
          %p418 = pneg %p68
        $region38: #{tpu_custom_call.1} parent=35 // pred_check_branch
          %420 = sbr.rel (%p418) target = $region40
        $region39: #{tpu_custom_call.1} parent=35 // pred_region
          %s421 = sand.u32 %s53, 1
          %s422 = scalar_lea.sflag [#allocation4], %s421
          %s423 = sand.u32 %s53, 1
          %s424 = smul.addr %s423, 16
          %s425 = scalar_lea.vmem [#allocation5], %s424
          %426 = dma.done %s422, 256
        $region40: #{tpu_custom_call.1} parent=35 // pred_fallthru
          _
      $region36: #{tpu_custom_call.1} parent=5 // pred_fallthru
        _
    $region6: #{tpu_custom_call.1} parent=1 // loop_footer
      %s17 = sadd.s32 1, %s13
    $region7: #{tpu_custom_call.1} parent=1 // loop_footer_branch
      %12 = sbr.rel target = $region3
    $region8: #{tpu_custom_call.1} parent=1 // loop_exit
      _
    %427 = vsyncpa [#allocation3], 1
    %s428 = scalar_lea.sflag [#allocation3], 1
    %429 = vsyncpa %s428, 1
    %430 = vsyncpa [#allocation4], 1
    %s431 = scalar_lea.sflag [#allocation4], 1
    %432 = vsyncpa %s431, 1

</llo_original>
